<compile_context>
chip_gen: v6e
topology: v6e:2x2x1
jax: 0.10.0
libtpu: 0.0.40
codegen_flags: <defaults>
</compile_context>

<pallas_src>
import functools
import math

import jax
import jax.numpy as jnp
from jax.experimental import pallas as pl
from jax.experimental.pallas import tpu as pltpu


# ----------------------------------------------------------------------------
# Helpers
# ----------------------------------------------------------------------------
def _round_up(x, m):
    return ((x + m - 1) // m) * m


def _compiler_params(buffer_bytes):
    """Parallel row-grid semantics + explicit scoped-VMEM budget."""
    limit = int(buffer_bytes * 1.5) + (2 << 20)          # headroom
    limit = max(8 << 20, min(limit, 64 << 20))           # cap for v7x (64 MiB VMEM)
    return pltpu.CompilerParams(
        dimension_semantics=("parallel",),
        vmem_limit_bytes=limit,
    )


# ----------------------------------------------------------------------------
# Kernel 1: fused Linear [+ReLU] + LayerNorm over the last dim (row-tiled).
#   x_ref: [TILE_M, K] bf16, w_ref: [K, N] bf16 (VMEM-resident),
#   b/g/beta: [1, N] f32,  o_ref: [TILE_M, N] f32.
# ----------------------------------------------------------------------------
def _linear_ln_kernel(x_ref, w_ref, b_ref, g_ref, beta_ref, o_ref, *,
                      apply_relu: bool, eps: float):
    y = jnp.dot(x_ref[...], w_ref[...], preferred_element_type=jnp.float32)
    y = y + b_ref[...]
    if apply_relu:
        y = jnp.maximum(y, 0.0)
    mean = jnp.mean(y, axis=-1, keepdims=True)
    var = jnp.mean((y - mean) ** 2, axis=-1, keepdims=True)   # biased, like torch LN
    y = (y - mean) * jax.lax.rsqrt(var + eps)
    o_ref[...] = (y * g_ref[...] + beta_ref[...]).astype(o_ref.dtype)


def linear_layernorm(x2d, w, b, gamma, beta, *, apply_relu=False,
                     eps=1e-12, tile_m=512):
    """x2d: [M, K], w: [K, N], b/gamma/beta: [N] -> [M, N] f32."""
    M, K = x2d.shape
    K2, N = w.shape
    assert K == K2

    x_bf = x2d.astype(jnp.bfloat16)
    w_bf = w.astype(jnp.bfloat16)

    tile = min(tile_m, _round_up(M, 8))
    Mp = _round_up(M, tile)
    if Mp != M:
        x_bf = jnp.pad(x_bf, ((0, Mp - M), (0, 0)))
    grid = (Mp // tile,)

    # x (double-buffered bf16) + resident weight + out (double-buffered f32) + params
    buf_bytes = 2 * tile * K * 2 + 2 * K * N * 2 + 2 * tile * N * 4 + 6 * N * 4

    out = pl.pallas_call(
        functools.partial(_linear_ln_kernel, apply_relu=apply_relu, eps=eps),
        out_shape=jax.ShapeDtypeStruct((Mp, N), jnp.float32),
        grid=grid,
        in_specs=[
            pl.BlockSpec((tile, K), lambda i: (i, 0)),   # x: streamed row tiles
            pl.BlockSpec((K, N), lambda i: (0, 0)),      # weight: VMEM-resident
            pl.BlockSpec((1, N), lambda i: (0, 0)),      # bias
            pl.BlockSpec((1, N), lambda i: (0, 0)),      # gamma
            pl.BlockSpec((1, N), lambda i: (0, 0)),      # beta
        ],
        out_specs=pl.BlockSpec((tile, N), lambda i: (i, 0)),
        compiler_params=_compiler_params(buf_bytes),
    )(x_bf, w_bf, b.reshape(1, N), gamma.reshape(1, N), beta.reshape(1, N))
    return out[:M]


# ----------------------------------------------------------------------------
# Kernel 2: fused (a+b+c+d + bias) -> ReLU -> LayerNorm (row-tiled).
# Used for the rel-pos path after pre-folding the frozen table through fus_w.
# ----------------------------------------------------------------------------
def _sum4_relu_ln_kernel(a_ref, b_ref, c_ref, d_ref, bias_ref, g_ref, beta_ref,
                         o_ref, *, eps: float):
    y = (a_ref[...].astype(jnp.float32) + b_ref[...].astype(jnp.float32) +
         c_ref[...].astype(jnp.float32) + d_ref[...].astype(jnp.float32))
    y = y + bias_ref[...]
    y = jnp.maximum(y, 0.0)
    mean = jnp.mean(y, axis=-1, keepdims=True)
    var = jnp.mean((y - mean) ** 2, axis=-1, keepdims=True)
    y = (y - mean) * jax.lax.rsqrt(var + eps)
    o_ref[...] = (y * g_ref[...] + beta_ref[...]).astype(o_ref.dtype)


def fused4_relu_layernorm(a, b, c, d, bias, gamma, beta, *, eps=1e-12,
                          tile_m=512):
    """a..d: [M, N] (bf16), bias/gamma/beta: [N] -> [M, N] f32."""
    M, N = a.shape
    tile = min(tile_m, _round_up(M, 8))
    Mp = _round_up(M, tile)
    if Mp != M:
        pads = ((0, Mp - M), (0, 0))
        a = jnp.pad(a, pads)
        b = jnp.pad(b, pads)
        c = jnp.pad(c, pads)
        d = jnp.pad(d, pads)
    grid = (Mp // tile,)

    in_itemsize = jnp.dtype(a.dtype).itemsize
    buf_bytes = 4 * 2 * tile * N * in_itemsize + 2 * tile * N * 4 + 6 * N * 4

    row_spec = pl.BlockSpec((tile, N), lambda i: (i, 0))
    vec_spec = pl.BlockSpec((1, N), lambda i: (0, 0))

    out = pl.pallas_call(
        functools.partial(_sum4_relu_ln_kernel, eps=eps),
        out_shape=jax.ShapeDtypeStruct((Mp, N), jnp.float32),
        grid=grid,
        in_specs=[row_spec, row_spec, row_spec, row_spec,
                  vec_spec, vec_spec, vec_spec],
        out_specs=pl.BlockSpec((tile, N), lambda i: (i, 0)),
        compiler_params=_compiler_params(buf_bytes),
    )(a, b, c, d, bias.reshape(1, N), gamma.reshape(1, N), beta.reshape(1, N))
    return out[:M]


# ----------------------------------------------------------------------------
# get_embedding (sinusoidal) -- parameter construction, plain JAX.
# ----------------------------------------------------------------------------
def get_embedding(max_seq_len, embedding_dim, rel_pos_init=0):
    num_embeddings = 2 * max_seq_len + 1
    half_dim = embedding_dim // 2
    scale = math.log(10000) / (half_dim - 1)
    freqs = jnp.exp(jnp.arange(half_dim, dtype=jnp.float32) * -scale)
    if rel_pos_init == 0:
        pos = jnp.arange(num_embeddings, dtype=jnp.float32)
    else:
        pos = jnp.arange(-max_seq_len, max_seq_len + 1, dtype=jnp.float32)
    emb = pos[:, None] * freqs[None, :]
    emb = jnp.concatenate([jnp.sin(emb), jnp.cos(emb)], axis=1).reshape(
        num_embeddings, -1)
    if embedding_dim % 2 == 1:
        emb = jnp.concatenate(
            [emb, jnp.zeros((num_embeddings, 1), jnp.float32)], axis=1)
    return emb


# ----------------------------------------------------------------------------
# Parameter init (deterministic, synthetic).
# ----------------------------------------------------------------------------
def init_params(key, vocab_size, hidden_size, max_seq_len, rel_pos_init=0):
    k0, k1, k2, k3, k4 = jax.random.split(key, 5)
    H = hidden_size
    word_emb = jax.random.normal(k0, (vocab_size, H), jnp.float32) * 0.02
    word_emb = word_emb.at[0].set(0.0)  # padding_idx=0

    lin_w = jax.random.normal(k1, (H, H), jnp.float32) * (1.0 / math.sqrt(H))
    lin_b = jax.random.normal(k2, (H,), jnp.float32) * 0.01

    ln_gamma = jnp.ones((H,), jnp.float32)
    ln_beta = jnp.zeros((H,), jnp.float32)

    rel_table = get_embedding(max_seq_len, H, rel_pos_init=rel_pos_init)
    rel_table = rel_table / rel_table.sum(axis=-1, keepdims=True)

    fus_w = jax.random.normal(k3, (4 * H, H), jnp.float32) * (1.0 / math.sqrt(4 * H))
    fus_b = jax.random.normal(k4, (H,), jnp.float32) * 0.01

    return dict(word_emb=word_emb, lin_w=lin_w, lin_b=lin_b,
                ln_gamma=ln_gamma, ln_beta=ln_beta,
                rel_table=rel_table, fus_w=fus_w, fus_b=fus_b)


# ----------------------------------------------------------------------------
# BertEmbeddings forward (position_type='flat').
# ----------------------------------------------------------------------------
def bert_embeddings_forward(params, input_ids, pos_s, pos_e, max_seq_len,
                            eps=1e-12):
    B, S = input_ids.shape
    H = params["lin_w"].shape[1]

    # --- word path: gather (glue) -> fused Linear + LayerNorm (Pallas) -------
    # TODO(synk): the gather could be fused into the kernel with
    # PrefetchScalarGridSpec + pl.Element once the vocab table fits residency.
    inputs_embeds = jnp.take(params["word_emb"], input_ids, axis=0)   # [B,S,H]
    input_embeds = linear_layernorm(
        inputs_embeds.reshape(B * S, H),
        params["lin_w"], params["lin_b"],
        params["ln_gamma"], params["ln_beta"],
        apply_relu=False, eps=eps,
    ).reshape(B, S, H)
    # dropout: identity at inference.

    # --- flat relative-position path -----------------------------------------
    # Pre-fold the frozen sinusoidal table through the four H-blocks of the
    # fusion weight (one tiny [2L+1,H]x[H,H] matmul each).  Then
    # Linear(concat([ss,se,es,ee])) == T_ss[idx_ss]+T_se[idx_se]+T_es[idx_es]
    # +T_ee[idx_ee]+bias, so the big per-pair matmul and the [B,S,S,4H] concat
    # disappear entirely.
    rel_table = params["rel_table"]                   # [2L+1, H], frozen
    fw = params["fus_w"]                              # [4H, H]
    t_ss = (rel_table @ fw[0 * H:1 * H]).astype(jnp.bfloat16)
    t_se = (rel_table @ fw[1 * H:2 * H]).astype(jnp.bfloat16)
    t_es = (rel_table @ fw[2 * H:3 * H]).astype(jnp.bfloat16)
    t_ee = (rel_table @ fw[3 * H:4 * H]).astype(jnp.bfloat16)

    idx_ss = (pos_s[:, :, None] - pos_s[:, None, :] + max_seq_len).reshape(-1)
    idx_se = (pos_s[:, :, None] - pos_e[:, None, :] + max_seq_len).reshape(-1)
    idx_es = (pos_e[:, :, None] - pos_s[:, None, :] + max_seq_len).reshape(-1)
    idx_ee = (pos_e[:, :, None] - pos_e[:, None, :] + max_seq_len).reshape(-1)

    g_ss = jnp.take(t_ss, idx_ss, axis=0)             # [B*S*S, H] bf16
    g_se = jnp.take(t_se, idx_se, axis=0)
    g_es = jnp.take(t_es, idx_es, axis=0)
    g_ee = jnp.take(t_ee, idx_ee, axis=0)

    rel_pos_embedding = fused4_relu_layernorm(
        g_ss, g_se, g_es, g_ee, params["fus_b"],
        params["ln_gamma"], params["ln_beta"], eps=eps,
    ).reshape(B, S, S, H)
    # dropout: identity at inference.

    return input_embeds, rel_pos_embedding, None


# ----------------------------------------------------------------------------
# Main
# ----------------------------------------------------------------------------
if __name__ == "__main__":
    B, S, H = 2, 8, 32
    VOCAB = 50
    MAX_SEQ_LEN = 16
    EPS = 1e-12

    key = jax.random.PRNGKey(0)
    kp, ki, ks, ke = jax.random.split(key, 4)

    params = init_params(kp, VOCAB, H, MAX_SEQ_LEN, rel_pos_init=0)

    input_ids = jax.random.randint(ki, (B, S), 1, VOCAB, dtype=jnp.int32)
    pos_s = jax.random.randint(ks, (B, S), 0, MAX_SEQ_LEN, dtype=jnp.int32)
    span = jax.random.randint(ke, (B, S), 0, 3, dtype=jnp.int32)
    pos_e = jnp.minimum(pos_s + span, MAX_SEQ_LEN - 1)

    input_embeds, rel_pos_embedding, abs_pos = bert_embeddings_forward(
        params, input_ids, pos_s, pos_e, MAX_SEQ_LEN, eps=EPS)

    jax.block_until_ready(input_embeds)
    jax.block_until_ready(rel_pos_embedding)

    # ---- plain-JAX f32 reference (matches the PyTorch module exactly) -------
    def ref_linear_ln(x, w, b, g, beta, relu):
        y = x @ w + b
        if relu:
            y = jnp.maximum(y, 0.0)
        mu = y.mean(-1, keepdims=True)
        var = ((y - mu) ** 2).mean(-1, keepdims=True)
        return (y - mu) / jnp.sqrt(var + EPS) * g + beta

    ref_inp = ref_linear_ln(params["word_emb"][input_ids], params["lin_w"],
                            params["lin_b"], params["ln_gamma"],
                            params["ln_beta"], False)

    idx_ss = pos_s[:, :, None] - pos_s[:, None, :] + MAX_SEQ_LEN
    idx_se = pos_s[:, :, None] - pos_e[:, None, :] + MAX_SEQ_LEN
    idx_es = pos_e[:, :, None] - pos_s[:, None, :] + MAX_SEQ_LEN
    idx_ee = pos_e[:, :, None] - pos_e[:, None, :] + MAX_SEQ_LEN
    p4 = jnp.concatenate(
        [params["rel_table"][idx_ss], params["rel_table"][idx_se],
         params["rel_table"][idx_es], params["rel_table"][idx_ee]], -1)
    ref_rel = ref_linear_ln(p4, params["fus_w"], params["fus_b"],
                            params["ln_gamma"], params["ln_beta"], True)

    # bf16 MXU inputs / bf16 pre-folded tables vs f32 reference: tolerance in
    # the 1e-2 range (LayerNorm renormalization keeps the error well bounded).
    assert jnp.allclose(input_embeds, ref_inp, atol=3e-2, rtol=3e-2), (
        float(jnp.max(jnp.abs(input_embeds - ref_inp))))
    assert jnp.allclose(rel_pos_embedding, ref_rel, atol=3e-2, rtol=3e-2), (
        float(jnp.max(jnp.abs(rel_pos_embedding - ref_rel))))
    assert abs_pos is None

    print("KERNEL_OK")
</pallas_src>

<mosaic_0001>
module attributes {stable_mosaic.version = 11 : i64} {
  func.func @_linear_ln_kernel(%arg0: i32, %arg1: memref<16x32xbf16, #tpu.memory_space<vmem>>, %arg2: memref<32x32xbf16, #tpu.memory_space<vmem>>, %arg3: memref<1x32xf32, #tpu.memory_space<vmem>>, %arg4: memref<1x32xf32, #tpu.memory_space<vmem>>, %arg5: memref<1x32xf32, #tpu.memory_space<vmem>>, %arg6: memref<16x32xf32, #tpu.memory_space<vmem>>) attributes {dimension_semantics = [#tpu.dimension_semantics<parallel>], iteration_bounds = array<i64: 1>, scalar_prefetch = 0 : i64, scratch_operands = 0 : i64, tpu.core_type = #tpu.core_type<tc>, window_params = [{transform_indices = @transform_0, window_bounds = array<i64: 16, 32>}, {pipeline_mode = #tpu.pipeline_mode<synchronous>, transform_indices = @transform_1, window_bounds = array<i64: 32, 32>}, {pipeline_mode = #tpu.pipeline_mode<synchronous>, transform_indices = @transform_2, window_bounds = array<i64: 1, 32>}, {pipeline_mode = #tpu.pipeline_mode<synchronous>, transform_indices = @transform_3, window_bounds = array<i64: 1, 32>}, {pipeline_mode = #tpu.pipeline_mode<synchronous>, transform_indices = @transform_4, window_bounds = array<i64: 1, 32>}, {transform_indices = @transform_5, window_bounds = array<i64: 16, 32>}]} {
    %c0 = arith.constant 0 : index
    %c0_0 = arith.constant 0 : index
    %0 = vector.load %arg1[%c0, %c0_0] : memref<16x32xbf16, #tpu.memory_space<vmem>>, vector<16x32xbf16>
    %c0_1 = arith.constant 0 : index
    %c0_2 = arith.constant 0 : index
    %1 = vector.load %arg2[%c0_1, %c0_2] : memref<32x32xbf16, #tpu.memory_space<vmem>>, vector<32x32xbf16>
    %cst = arith.constant dense<0.000000e+00> : vector<16x32xf32>
    %2 = tpu.matmul %0, %1, %cst {dimension_numbers = #tpu.dot_dimension_numbers<[1], [0], [0], [1], [0, 0, 1, 1], [], []>} : vector<16x32xbf16>, vector<32x32xbf16>, vector<16x32xf32> -> vector<16x32xf32>
    %c0_3 = arith.constant 0 : index
    %c0_4 = arith.constant 0 : index
    %3 = vector.load %arg3[%c0_3, %c0_4] : memref<1x32xf32, #tpu.memory_space<vmem>>, vector<1x32xf32>
    %4 = vector.broadcast %3 : vector<1x32xf32> to vector<16x32xf32>
    %5 = arith.addf %2, %4 : vector<16x32xf32>
    %cst_5 = arith.constant dense<0.000000e+00> : vector<16xf32>
    %6 = vector.multi_reduction <add>, %5, %cst_5 [1] : vector<16x32xf32> to vector<16xf32>
    %7 = vector.shape_cast %6 : vector<16xf32> to vector<16x1xf32>
    %cst_6 = arith.constant 3.200000e+01 : f32
    %8 = vector.broadcast %cst_6 : f32 to vector<16x1xf32>
    %9 = arith.divf %7, %8 : vector<16x1xf32>
    %10 = vector.broadcast %9 : vector<16x1xf32> to vector<16x32xf32>
    %11 = arith.subf %5, %10 : vector<16x32xf32>
    %12 = arith.mulf %11, %11 : vector<16x32xf32>
    %cst_7 = arith.constant dense<0.000000e+00> : vector<16xf32>
    %13 = vector.multi_reduction <add>, %12, %cst_7 [1] : vector<16x32xf32> to vector<16xf32>
    %14 = vector.shape_cast %13 : vector<16xf32> to vector<16x1xf32>
    %cst_8 = arith.constant 3.200000e+01 : f32
    %15 = vector.broadcast %cst_8 : f32 to vector<16x1xf32>
    %16 = arith.divf %14, %15 : vector<16x1xf32>
    %17 = vector.broadcast %9 : vector<16x1xf32> to vector<16x32xf32>
    %18 = arith.subf %5, %17 : vector<16x32xf32>
    %cst_9 = arith.constant 9.99999996E-13 : f32
    %19 = vector.broadcast %cst_9 : f32 to vector<16x1xf32>
    %20 = arith.addf %16, %19 : vector<16x1xf32>
    %21 = math.rsqrt %20 : vector<16x1xf32>
    %22 = vector.broadcast %21 : vector<16x1xf32> to vector<16x32xf32>
    %23 = arith.mulf %18, %22 : vector<16x32xf32>
    %c0_10 = arith.constant 0 : index
    %c0_11 = arith.constant 0 : index
    %24 = vector.load %arg4[%c0_10, %c0_11] : memref<1x32xf32, #tpu.memory_space<vmem>>, vector<1x32xf32>
    %25 = vector.broadcast %24 : vector<1x32xf32> to vector<16x32xf32>
    %26 = arith.mulf %23, %25 : vector<16x32xf32>
    %c0_12 = arith.constant 0 : index
    %c0_13 = arith.constant 0 : index
    %27 = vector.load %arg5[%c0_12, %c0_13] : memref<1x32xf32, #tpu.memory_space<vmem>>, vector<1x32xf32>
    %28 = vector.broadcast %27 : vector<1x32xf32> to vector<16x32xf32>
    %29 = arith.addf %26, %28 : vector<16x32xf32>
    %c0_14 = arith.constant 0 : index
    %c0_15 = arith.constant 0 : index
    %30 = vector.load %arg6[%c0_14, %c0_15] : memref<16x32xf32, #tpu.memory_space<vmem>>, vector<16x32xf32>
    tpu.vector_store %arg6[%c0_14, %c0_15], %29 {strides = array<i32>} : memref<16x32xf32, #tpu.memory_space<vmem>>, vector<16x32xf32>,
    return
  }
  func.func @transform_0(%arg0: i32) -> (i32, i32) {
    %c0_i32 = arith.constant 0 : i32
    %c0_i32_0 = arith.constant 0 : i32
    return %arg0, %c0_i32 : i32, i32
  }
  func.func @transform_1(%arg0: i32) -> (i32, i32) {
    %c0_i32 = arith.constant 0 : i32
    %c0_i32_0 = arith.constant 0 : i32
    %c0_i32_1 = arith.constant 0 : i32
    return %c0_i32, %c0_i32_0 : i32, i32
  }
  func.func @transform_2(%arg0: i32) -> (i32, i32) {
    %c0_i32 = arith.constant 0 : i32
    %c0_i32_0 = arith.constant 0 : i32
    %c0_i32_1 = arith.constant 0 : i32
    return %c0_i32, %c0_i32_0 : i32, i32
  }
  func.func @transform_3(%arg0: i32) -> (i32, i32) {
    %c0_i32 = arith.constant 0 : i32
    %c0_i32_0 = arith.constant 0 : i32
    %c0_i32_1 = arith.constant 0 : i32
    return %c0_i32, %c0_i32_0 : i32, i32
  }
  func.func @transform_4(%arg0: i32) -> (i32, i32) {
    %c0_i32 = arith.constant 0 : i32
    %c0_i32_0 = arith.constant 0 : i32
    %c0_i32_1 = arith.constant 0 : i32
    return %c0_i32, %c0_i32_0 : i32, i32
  }
  func.func @transform_5(%arg0: i32) -> (i32, i32) {
    %c0_i32 = arith.constant 0 : i32
    %c0_i32_0 = arith.constant 0 : i32
    return %arg0, %c0_i32 : i32, i32
  }
}

</mosaic_0001>

<llo_original>
// kernel: tpu_custom_call.1
$region0: #{tpu_custom_call.1}
  #allocation0 [shape = 'u32[]', space=smem, size = 0x4, offset = 0x4, fixed_abs, tag = 'smem constant byte address 0x4 - core index']
  #allocation1 [shape = 'u32[144,128]{1,0:T(1,128)}', space=vmem, size = 0x12000, scoped, tag = 'internal scratch']
  %s0 = inlined_call_operand.hbm [shape: bf16[16,32], index: 0, kind: input, shape index: {}]
  %s1 = inlined_call_operand.hbm [shape: bf16[32,32], index: 1, kind: input, shape index: {}]
  %s2 = inlined_call_operand.vmem [shape: f32[1,32], index: 2, kind: input, shape index: {}]
  %s3 = inlined_call_operand.vmem [shape: f32[1,32], index: 3, kind: input, shape index: {}]
  %s4 = inlined_call_operand.vmem [shape: f32[1,32], index: 4, kind: input, shape index: {}]
  %s5 = inlined_call_operand.hbm [shape: f32[16,32], index: 5, kind: output, shape index: {}]
  %s6 = sld [smem:[#allocation0]]
  $region38: #{tpu_custom_call.1} parent=0
    _
  %s8 = ssub.s32 1, %s6
  %s9 = scalar_select 0, %s8, %s6
  $region1: #{tpu_custom_call.1} parent=0
    #allocation2 [shape = 'u8[4096]{0}', space=vmem, size = 0x1000, scoped, tag = 'input window, operand 0, single buffered']
    #allocation3 [shape = 's32[1]{0}', space=sflag, size = 0x4, scoped, tag = 'scoped memory for tpu_custom_call.1']
    #allocation4 [shape = 's32[1]{0}', space=sflag, size = 0x4, scoped, tag = 'scoped memory for tpu_custom_call.1']
    #allocation5 [shape = 'u8[8192]{0}', space=vmem, size = 0x2000, scoped, tag = 'input window, operand 1, single buffered']
    #allocation6 [shape = 's32[1]{0}', space=sflag, size = 0x4, scoped, tag = 'scoped memory for tpu_custom_call.1']
    #allocation7 [shape = 'u8[8192]{0}', space=vmem, size = 0x2000, scoped, tag = 'output window, operand 0, single buffered']
    %10 = vsyncpa [#allocation3], 0
    %11 = vsyncpa [#allocation6], 0
    %12 = vsyncpa [#allocation4], 0
    // Predicated region
    $region2: #{tpu_custom_call.1} parent=1 // pred_check
      _
    $region3: #{tpu_custom_call.1} parent=1 // pred_check_branch
      %14 = sbr.rel (0) target = $region5
    $region4: #{tpu_custom_call.1} parent=1 // pred_region
      %s16 = ssub.s32 128, 128
      %17 = vsyncadd [#allocation3], %s16
      %s18 = sshll.u32 [#allocation2], 4
      %s19 = int_to_ptr.vmem [resolvable:$true] %s18
      %24 = dma.hbm_to_vmem [thread:$0]  %s0, 128, %s19, [#allocation3], 64, 64, 4
    $region5: #{tpu_custom_call.1} parent=1 // pred_fallthru
      _
    // Predicated region
    $region6: #{tpu_custom_call.1} parent=1 // pred_check
      _
    $region7: #{tpu_custom_call.1} parent=1 // pred_check_branch
      %26 = sbr.rel (0) target = $region9
    $region8: #{tpu_custom_call.1} parent=1 // pred_region
      %s28 = ssub.s32 256, 256
      %29 = vsyncadd [#allocation6], %s28
      %s30 = sshll.u32 [#allocation5], 4
      %s31 = int_to_ptr.vmem [resolvable:$true] %s30
      %36 = dma.hbm_to_vmem [thread:$0]  %s1, 256, %s31, [#allocation6], 64, 64, 4
    $region9: #{tpu_custom_call.1} parent=1 // pred_fallthru
      _
    // Predicated region
    $region10: #{tpu_custom_call.1} parent=1 // pred_check
      _
    $region11: #{tpu_custom_call.1} parent=1 // pred_check_branch
      %38 = sbr.rel (0) target = $region13
    $region12: #{tpu_custom_call.1} parent=1 // pred_region
      _
    $region13: #{tpu_custom_call.1} parent=1 // pred_fallthru
      _
    // Predicated region
    $region14: #{tpu_custom_call.1} parent=1 // pred_check
      _
    $region15: #{tpu_custom_call.1} parent=1 // pred_check_branch
      %40 = sbr.rel (0) target = $region17
    $region16: #{tpu_custom_call.1} parent=1 // pred_region
      _
    $region17: #{tpu_custom_call.1} parent=1 // pred_fallthru
      _
    // Predicated region
    $region18: #{tpu_custom_call.1} parent=1 // pred_check
      _
    $region19: #{tpu_custom_call.1} parent=1 // pred_check_branch
      %42 = sbr.rel (0) target = $region21
    $region20: #{tpu_custom_call.1} parent=1 // pred_region
      _
    $region21: #{tpu_custom_call.1} parent=1 // pred_fallthru
      _
    // Predicated region
    $region22: #{tpu_custom_call.1} parent=1 // pred_check
      _
    $region23: #{tpu_custom_call.1} parent=1 // pred_check_branch
      %44 = sbr.rel (0) target = $region25
    $region24: #{tpu_custom_call.1} parent=1 // pred_region
      %45 = dma.done [#allocation3], 128
    $region25: #{tpu_custom_call.1} parent=1 // pred_fallthru
      _
    // Predicated region
    $region26: #{tpu_custom_call.1} parent=1 // pred_check
      _
    $region27: #{tpu_custom_call.1} parent=1 // pred_check_branch
      %47 = sbr.rel (0) target = $region29
    $region28: #{tpu_custom_call.1} parent=1 // pred_region
      %48 = dma.done [#allocation6], 256
    $region29: #{tpu_custom_call.1} parent=1 // pred_fallthru
      _
    %v50 = vld [vmem:[#allocation2] sm:$0xf]
    %v51 = vld [vmem:[#allocation2 + $0x4] sm:$0xf]
    %v52 = vld [vmem:[#allocation5] sm:$0xf]
    %v53 = vld [vmem:[#allocation5 + $0x4] sm:$0xf]
    %v54 = vld [vmem:[#allocation5 + $0x8] sm:$0xf]
    %v55 = vld [vmem:[#allocation5 + $0xc] sm:$0xf]
    %v56 = vld [vmem:[%s2] sm:$0x1]
    %v58 = vlaneseq
    %v59 = vshrl.u32 %v58, 7
    %v60 = vsub.s32 0, %v59
    %v61 = vrot.slane %v56, %v60
    %v65 = vunpack.c.l.b16 %v50
    %v66 = vunpack.c.l.b16 %v51
    %v67 = vpack.c.b16 %v66, %v65
    %v72 = vunpack.c.l.b16 %v52
    %v73 = vunpack.c.l.b16 %v53
    %v74 = vunpack.c.l.b16 %v54
    %v75 = vunpack.c.l.b16 %v55
    %v76 = vpack.c.b16 %v73, %v72
    %v77 = vpack.c.b16 %v75, %v74
    %vm80 = vcmask 261120
    %v82 = vsel %vm80, %v67, 0
    %84 = vmatprep.subr.bf16.mxu0 0
    %85 = vmatpush1.bf16.msra.mxu0 0
    %86 = vmatprep.subr.bf16.mxu0 0
    %87 = vmatpush1.bf16.msra.mxu0 0
    %88 = vmatprep.subr.bf16.mxu0 0
    %89 = vmatpush1.bf16.msra.mxu0 0
    %90 = vmatprep.subr.bf16.mxu0 0
    %91 = vmatpush1.bf16.msra.mxu0 0
    %92 = vmatprep.subr.bf16.mxu0 0
    %93 = vmatpush1.bf16.msra.mxu0 0
    %94 = vmatprep.subr.bf16.mxu0 0
    %95 = vmatpush1.bf16.msra.mxu0 0
    %96 = vmatprep.subr.bf16.mxu0 0
    %97 = vmatpush1.bf16.msra.mxu0 %v77
    %98 = vmatprep.subr.bf16.mxu0 0
    %99 = vmatpush1.bf16.msra.mxu0 %v76
    %100 = vmatprep.subr.bf16.mxu0 0
    %101 = vmatpush2.bf16.msra.mxu0 0
    %102 = vmatprep.subr.bf16.mxu0 0
    %103 = vmatpush2.bf16.msra.mxu0 0
    %104 = vmatprep.subr.bf16.mxu0 0
    %105 = vmatpush2.bf16.msra.mxu0 0
    %106 = vmatprep.subr.bf16.mxu0 0
    %107 = vmatpush2.bf16.msra.mxu0 0
    %108 = vmatprep.subr.bf16.mxu0 0
    %109 = vmatpush2.bf16.msra.mxu0 0
    %110 = vmatprep.subr.bf16.mxu0 0
    %111 = vmatpush2.bf16.msra.mxu0 0
    %112 = vmatprep.subr.bf16.mxu0 0
    %113 = vmatpush2.bf16.msra.mxu0 0
    %114 = vmatprep.subr.bf16.mxu0 0
    %115 = vmatpush2.bf16.msra.mxu0 0
    %116 = vmatprep.mubr.bf16.mxu0 0
    %117 = vmatmul.mubr.bf16.gmra.mxu0 %v82
    %v118 = vpop.f32.mrf.mxu0
    %v119 = vadd.f32 %v61, %v118
    %v120 = vpop.f32.mrf.mxu0
    %v121 = vpop.f32.mrf.mxu0
    %v122 = vadd.f32 %v61, %v121
    %v123 = vpop.f32.mrf.mxu0
    %124 = vdwg.mxu0
    %v125 = vsel %vm80, %v119, 0.0
    %126 = vadd.xlane.f32.xlu0 %v125
    %v127 = vpop.xlane.xlu0 %126
    %v128 = vsel %vm80, %v122, 0.0
    %129 = vadd.xlane.f32.xlu0 %v128
    %v130 = vpop.xlane.xlu0 %129
    %v131 = vrcp.pop 32.0
    %v132 = vmul.f32 %v127, %v131
    %v133 = vmul.f32 %v130, %v131
    %v134 = vsub.f32 %v119, %v132
    %v135 = vsub.f32 %v122, %v133
    %v136 = vmul.f32 %v134, %v134
    %v137 = vmul.f32 %v135, %v135
    %v138 = vsel %vm80, %v136, 0.0
    %139 = vadd.xlane.f32.xlu0 %v138
    %v140 = vpop.xlane.xlu0 %139
    %v141 = vsel %vm80, %v137, 0.0
    %142 = vadd.xlane.f32.xlu0 %v141
    %v143 = vpop.xlane.xlu0 %142
    %v144 = vmul.f32 %v140, %v131
    %v145 = vmul.f32 %v143, %v131
    %v146 = vadd.f32 %v144, 1e-12
    %v147 = vadd.f32 %v145, 1e-12
    %v148 = vrsqrt.pop %v146
    %v149 = vrsqrt.pop %v147
    %v150 = vmul.f32 %v134, %v148
    %v151 = vmul.f32 %v135, %v149
    %v152 = vld [vmem:[%s3] sm:$0x1]
    %v154 = vlaneseq
    %v155 = vshrl.u32 %v154, 7
    %v156 = vsub.s32 0, %v155
    %v157 = vrot.slane %v152, %v156
    %v159 = vmul.f32 %v150, %v157
    %v160 = vmul.f32 %v151, %v157
    %v161 = vld [vmem:[%s4] sm:$0x1]
    %v163 = vlaneseq
    %v164 = vshrl.u32 %v163, 7
    %v165 = vsub.s32 0, %v164
    %v166 = vrot.slane %v161, %v165
    %v168 = vadd.f32 %v159, %v166
    %v169 = vadd.f32 %v160, %v166
    %170 = vst.msk [vmem:[#allocation7] sm:$0xff] %vm80, %v168
    %171 = vst.msk [vmem:[#allocation7 + $0x8] sm:$0xff] %vm80, %v169
    // Predicated region
    $region30: #{tpu_custom_call.1} parent=1 // pred_check
      _
    $region31: #{tpu_custom_call.1} parent=1 // pred_check_branch
      %173 = sbr.rel (0) target = $region33
    $region32: #{tpu_custom_call.1} parent=1 // pred_region
      %s175 = ssub.s32 256, 256
      %176 = vsyncadd [#allocation4], %s175
      %s177 = sshll.u32 [#allocation7], 4
      %s178 = int_to_ptr.vmem [resolvable:$true] %s177
      %183 = dma.vmem_to_hbm [thread:$0]  %s178, 256, %s5, [#allocation4], 128, 128, 8
    $region33: #{tpu_custom_call.1} parent=1 // pred_fallthru
      _
    // Predicated region
    $region34: #{tpu_custom_call.1} parent=1 // pred_check
      _
    $region35: #{tpu_custom_call.1} parent=1 // pred_check_branch
      %185 = sbr.rel (0) target = $region37
    $region36: #{tpu_custom_call.1} parent=1 // pred_region
      %186 = dma.done [#allocation4], 256
    $region37: #{tpu_custom_call.1} parent=1 // pred_fallthru
      _
    %187 = vsyncpa [#allocation3], 1
    %188 = vsyncpa [#allocation6], 1
    %189 = vsyncpa [#allocation4], 1

</llo_original>
